<compile_context>
chip_gen: v5e
topology: v5e:2x2
jax: 0.10.0
libtpu: 0.0.40
codegen_flags: <defaults>
</compile_context>

<pallas_src>
import functools

import jax
import jax.numpy as jnp
from jax import lax
from jax.experimental import pallas as pl
from jax.experimental.pallas import tpu as pltpu


def _round_up(x, m):
    return (x + m - 1) // m * m


def _pick_b_tile(n):
    # Batch several images per grid step to amortize per-step overhead and the
    # MXU weight push, while keeping >=4 (or at least 2) grid steps so the
    # BlockSpec double-buffer pipeline / both v7x TensorCores stay busy.
    for bt in (8, 4, 2):
        if n % bt == 0 and n // bt >= 4:
            return bt
    for bt in (4, 2):
        if n % bt == 0 and n // bt >= 2:
            return bt
    return 1


def _coordconv_kernel(x_ref, w_ref, add_ref, o_ref, patches_ref, *,
                      wp, cin_pad, lout_pad, b_tile):
    # x_ref:       (B_TILE, Cin_pad, Lin)        bf16 zero-padded images (row stride wp)
    # w_ref:       (Cout, 9*Cin_pad)             bf16 BN-scale-folded weights, tap-major
    # add_ref:     (Cout, Lout_pad)              f32 coord-conv contribution + BN bias
    # o_ref:       (B_TILE, Cout, Lout_pad)      output; valid columns q = i*wp + j, j < W
    # patches_ref: (9*Cin_pad, B_TILE*Lout_pad)  bf16 im2col scratch (fully rewritten per step)
    for b in range(b_tile):                      # static, unrolled at trace time
        for kh in range(3):
            for kw in range(3):
                t = kh * 3 + kw
                s = kh * wp + kw                 # static lane offset of this tap
                patches_ref[t * cin_pad:(t + 1) * cin_pad,
                            b * lout_pad:(b + 1) * lout_pad] = x_ref[b, :, s:s + lout_pad]
    acc = jnp.dot(w_ref[...], patches_ref[...],
                  preferred_element_type=jnp.float32)   # single MXU matmul, f32 acc
    for b in range(b_tile):                      # 128-multiple, lane-aligned slices/stores
        y = acc[:, b * lout_pad:(b + 1) * lout_pad] + add_ref[...]
        o_ref[b] = jnp.maximum(y, 0.0).astype(o_ref.dtype)


@jax.jit
def coordconv_forward(x_nchw, weight_oihw, gamma, beta, run_mean, run_var, eps=1e-5):
    """x_nchw: (N, Cin, H, W); weight_oihw: (Cout, Cin+2, 3, 3). Returns (N, Cout, H, W)."""
    n, cin, h, w = x_nchw.shape
    cout = weight_oihw.shape[0]
    hp, wp = h + 2, w + 2
    lout = h * wp                                  # valid outputs at lane q = i*wp + j (j < w)
    lout_pad = _round_up(lout, 128)                # 128-multiple output lane width
    cin_pad = _round_up(cin, 8)                    # 8-sublane-aligned tap groups
    s_max = 2 * wp + 2                             # largest tap lane offset
    b_tile = _pick_b_tile(n)
    # enough padded rows so every tap slice x[:, s:s+lout_pad] stays in bounds (rows are zeros)
    hp_ext = max(hp, -(-(lout_pad + s_max) // wp))
    lin = hp_ext * wp

    # ---- parameter-side preprocessing (batch-independent, done once in XLA) ----
    scale = gamma / jnp.sqrt(run_var + eps)                         # (Cout,)
    bias = beta - run_mean * scale                                  # (Cout,)
    w_folded = weight_oihw.astype(jnp.float32) * scale[:, None, None, None]
    w_real = w_folded[:, :cin]                                      # (Cout, Cin, 3, 3)
    w_coord = w_folded[:, cin:]                                     # (Cout, 2, 3, 3)
    # matmul weight (Cout, 9*Cin_pad): tap-major (kh, kw, c) with channels zero-padded to Cin_pad
    w_t = jnp.transpose(w_real, (0, 2, 3, 1))                       # (Cout, 3, 3, Cin)
    w_t = jnp.pad(w_t, ((0, 0), (0, 0), (0, 0), (0, cin_pad - cin)))
    w_mat = w_t.reshape(cout, 9 * cin_pad).astype(jnp.bfloat16)

    # coordinate-channel contribution is input-independent -> constant-fold it once
    x_range = jnp.linspace(-1.0, 1.0, w, dtype=jnp.float32)         # varies along width
    y_range = jnp.linspace(-1.0, 1.0, h, dtype=jnp.float32)         # varies along height
    yy, xx = jnp.meshgrid(y_range, x_range, indexing='ij')          # (h, w) each
    coords = jnp.stack([xx, yy], axis=0)[None]                      # (1, 2, H, W), [x, y] order
    coord_conv = lax.conv_general_dilated(
        coords, w_coord, window_strides=(1, 1), padding='SAME',
        dimension_numbers=('NCHW', 'OIHW', 'NCHW'))[0]              # (Cout, H, W), f32
    addmap = coord_conv + bias[:, None, None]                       # + folded BN bias
    addmap = jnp.pad(addmap, ((0, 0), (0, 0), (0, wp - w))).reshape(cout, lout)
    addmap = jnp.pad(addmap, ((0, 0), (0, lout_pad - lout)))        # (Cout, Lout_pad)

    # ---- data-side preprocessing: ONE fused bf16-cast + pad + (free) reshape ----
    x_slab = jnp.pad(x_nchw.astype(jnp.bfloat16),
                     ((0, 0), (0, cin_pad - cin), (1, hp_ext - h - 1), (1, 1)))
    x_slab = x_slab.reshape(n, cin_pad, lin)                        # (N, Cin_pad, Lin), bf16

    kernel = functools.partial(_coordconv_kernel, wp=wp, cin_pad=cin_pad,
                               lout_pad=lout_pad, b_tile=b_tile)

    out_flat = pl.pallas_call(
        kernel,
        out_shape=jax.ShapeDtypeStruct((n, cout, lout_pad), x_nchw.dtype),
        grid_spec=pltpu.PrefetchScalarGridSpec(
            num_scalar_prefetch=0,
            grid=(n // b_tile,),                                    # parallel over image tiles
            in_specs=[
                pl.BlockSpec((b_tile, cin_pad, lin), lambda b: (b, 0, 0)),
                pl.BlockSpec((cout, 9 * cin_pad), lambda b: (0, 0)),
                pl.BlockSpec((cout, lout_pad), lambda b: (0, 0)),
            ],
            out_specs=pl.BlockSpec((b_tile, cout, lout_pad), lambda b: (b, 0, 0)),
            scratch_shapes=[pltpu.VMEM((9 * cin_pad, b_tile * lout_pad), jnp.bfloat16)],
        ),
        compiler_params=pltpu.CompilerParams(
            dimension_semantics=("parallel",),
            vmem_limit_bytes=32 * 1024 * 1024),
    )(x_slab, w_mat, addmap)

    # recover NCHW: drop the lane padding, columns q = i*wp + j; keep j < W.
    out = out_flat[:, :, :lout].reshape(n, cout, h, wp)[:, :, :, :w]
    return out


def _reference(x_nchw, weight_oihw, gamma, beta, run_mean, run_var, eps=1e-5):
    n, c, h, w = x_nchw.shape
    x_range = jnp.linspace(-1.0, 1.0, w, dtype=jnp.float32)
    y_range = jnp.linspace(-1.0, 1.0, h, dtype=jnp.float32)
    yy, xx = jnp.meshgrid(y_range, x_range, indexing='ij')
    coords = jnp.broadcast_to(jnp.stack([xx, yy], axis=0)[None], (n, 2, h, w))
    x_aug = jnp.concatenate([x_nchw, coords], axis=1)
    y = lax.conv_general_dilated(
        x_aug, weight_oihw, window_strides=(1, 1), padding='SAME',
        dimension_numbers=('NCHW', 'OIHW', 'NCHW'))
    scale = gamma / jnp.sqrt(run_var + eps)
    bias = beta - run_mean * scale
    y = y * scale[None, :, None, None] + bias[None, :, None, None]
    return jnp.maximum(y, 0.0)


if __name__ == "__main__":
    key = jax.random.PRNGKey(0)
    N, Cin, H, W = 2, 4, 16, 16
    Cout = 8
    Cin2 = Cin + 2  # +2 coordinate channels

    k_x, k_w, k_g, k_b, k_m, k_v = jax.random.split(key, 6)
    x = jax.random.normal(k_x, (N, Cin, H, W), dtype=jnp.float32)
    # Conv2d weight in PyTorch OIHW layout: (Cout, Cin+2, 3, 3), bias=False.
    weight = (jax.random.normal(k_w, (Cout, Cin2, 3, 3), dtype=jnp.float32)
              / jnp.sqrt(Cin2 * 9.0))
    # Deterministic BatchNorm parameters / running stats (eval-mode semantics).
    gamma = 1.0 + 0.1 * jax.random.normal(k_g, (Cout,), dtype=jnp.float32)
    beta = 0.1 * jax.random.normal(k_b, (Cout,), dtype=jnp.float32)
    run_mean = 0.05 * jax.random.normal(k_m, (Cout,), dtype=jnp.float32)
    run_var = 1.0 + 0.1 * jax.random.uniform(k_v, (Cout,), dtype=jnp.float32)

    out = coordconv_forward(x, weight, gamma, beta, run_mean, run_var)
    out = jax.block_until_ready(out)

    ref = _reference(x, weight, gamma, beta, run_mean, run_var)
    assert out.shape == (N, Cout, H, W), out.shape
    max_err = float(jnp.max(jnp.abs(out - ref)))
    # bf16 MXU operands with f32 accumulation -> relaxed tolerance vs the f32 reference.
    assert jnp.allclose(out, ref, rtol=5e-2, atol=5e-2), max_err

    print("KERNEL_OK")
</pallas_src>

<mosaic_0001>
module attributes {stable_mosaic.version = 11 : i64} {
  func.func @_coordconv_kernel(%arg0: i32, %arg1: memref<1x8x432xbf16, #tpu.memory_space<vmem>>, %arg2: memref<8x72xbf16, #tpu.memory_space<vmem>>, %arg3: memref<8x384xf32, #tpu.memory_space<vmem>>, %arg4: memref<1x8x384xf32, #tpu.memory_space<vmem>>, %arg5: memref<72x384xbf16, #tpu.memory_space<vmem>>) attributes {dimension_semantics = [#tpu.dimension_semantics<parallel>], iteration_bounds = array<i64: 2>, scalar_prefetch = 0 : i64, scratch_operands = 1 : i64, tpu.core_type = #tpu.core_type<tc>, window_params = [{transform_indices = @transform_0, window_bounds = array<i64: 1, 8, 432>}, {pipeline_mode = #tpu.pipeline_mode<synchronous>, transform_indices = @transform_1, window_bounds = array<i64: 8, 72>}, {pipeline_mode = #tpu.pipeline_mode<synchronous>, transform_indices = @transform_2, window_bounds = array<i64: 8, 384>}, {transform_indices = @transform_3, window_bounds = array<i64: 1, 8, 384>}]} {
    %c0 = arith.constant 0 : index
    %c0_0 = arith.constant 0 : index
    %c0_1 = arith.constant 0 : index
    %0 = vector.load %arg1[%c0, %c0_0, %c0_1] : memref<1x8x432xbf16, #tpu.memory_space<vmem>>, vector<1x8x384xbf16>
    %1 = vector.shape_cast %0 : vector<1x8x384xbf16> to vector<8x384xbf16>
    %c0_2 = arith.constant 0 : index
    %c0_3 = arith.constant 0 : index
    %2 = vector.load %arg5[%c0_2, %c0_3] : memref<72x384xbf16, #tpu.memory_space<vmem>>, vector<8x384xbf16>
    tpu.vector_store %arg5[%c0_2, %c0_3], %1 {strides = array<i32>} : memref<72x384xbf16, #tpu.memory_space<vmem>>, vector<8x384xbf16>,
    %c0_4 = arith.constant 0 : index
    %c0_5 = arith.constant 0 : index
    %c1 = arith.constant 1 : index
    %3 = vector.load %arg1[%c0_4, %c0_5, %c1] : memref<1x8x432xbf16, #tpu.memory_space<vmem>>, vector<1x8x384xbf16>
    %4 = vector.shape_cast %3 : vector<1x8x384xbf16> to vector<8x384xbf16>
    %c8 = arith.constant 8 : index
    %c0_6 = arith.constant 0 : index
    %5 = vector.load %arg5[%c8, %c0_6] : memref<72x384xbf16, #tpu.memory_space<vmem>>, vector<8x384xbf16>
    tpu.vector_store %arg5[%c8, %c0_6], %4 {strides = array<i32>} : memref<72x384xbf16, #tpu.memory_space<vmem>>, vector<8x384xbf16>,
    %c0_7 = arith.constant 0 : index
    %c0_8 = arith.constant 0 : index
    %c2 = arith.constant 2 : index
    %6 = vector.load %arg1[%c0_7, %c0_8, %c2] : memref<1x8x432xbf16, #tpu.memory_space<vmem>>, vector<1x8x384xbf16>
    %7 = vector.shape_cast %6 : vector<1x8x384xbf16> to vector<8x384xbf16>
    %c16 = arith.constant 16 : index
    %c0_9 = arith.constant 0 : index
    %8 = vector.load %arg5[%c16, %c0_9] : memref<72x384xbf16, #tpu.memory_space<vmem>>, vector<8x384xbf16>
    tpu.vector_store %arg5[%c16, %c0_9], %7 {strides = array<i32>} : memref<72x384xbf16, #tpu.memory_space<vmem>>, vector<8x384xbf16>,
    %c0_10 = arith.constant 0 : index
    %c0_11 = arith.constant 0 : index
    %c18 = arith.constant 18 : index
    %9 = vector.load %arg1[%c0_10, %c0_11, %c18] : memref<1x8x432xbf16, #tpu.memory_space<vmem>>, vector<1x8x384xbf16>
    %10 = vector.shape_cast %9 : vector<1x8x384xbf16> to vector<8x384xbf16>
    %c24 = arith.constant 24 : index
    %c0_12 = arith.constant 0 : index
    %11 = vector.load %arg5[%c24, %c0_12] : memref<72x384xbf16, #tpu.memory_space<vmem>>, vector<8x384xbf16>
    tpu.vector_store %arg5[%c24, %c0_12], %10 {strides = array<i32>} : memref<72x384xbf16, #tpu.memory_space<vmem>>, vector<8x384xbf16>,
    %c0_13 = arith.constant 0 : index
    %c0_14 = arith.constant 0 : index
    %c19 = arith.constant 19 : index
    %12 = vector.load %arg1[%c0_13, %c0_14, %c19] : memref<1x8x432xbf16, #tpu.memory_space<vmem>>, vector<1x8x384xbf16>
    %13 = vector.shape_cast %12 : vector<1x8x384xbf16> to vector<8x384xbf16>
    %c32 = arith.constant 32 : index
    %c0_15 = arith.constant 0 : index
    %14 = vector.load %arg5[%c32, %c0_15] : memref<72x384xbf16, #tpu.memory_space<vmem>>, vector<8x384xbf16>
    tpu.vector_store %arg5[%c32, %c0_15], %13 {strides = array<i32>} : memref<72x384xbf16, #tpu.memory_space<vmem>>, vector<8x384xbf16>,
    %c0_16 = arith.constant 0 : index
    %c0_17 = arith.constant 0 : index
    %c20 = arith.constant 20 : index
    %15 = vector.load %arg1[%c0_16, %c0_17, %c20] : memref<1x8x432xbf16, #tpu.memory_space<vmem>>, vector<1x8x384xbf16>
    %16 = vector.shape_cast %15 : vector<1x8x384xbf16> to vector<8x384xbf16>
    %c40 = arith.constant 40 : index
    %c0_18 = arith.constant 0 : index
    %17 = vector.load %arg5[%c40, %c0_18] : memref<72x384xbf16, #tpu.memory_space<vmem>>, vector<8x384xbf16>
    tpu.vector_store %arg5[%c40, %c0_18], %16 {strides = array<i32>} : memref<72x384xbf16, #tpu.memory_space<vmem>>, vector<8x384xbf16>,
    %c0_19 = arith.constant 0 : index
    %c0_20 = arith.constant 0 : index
    %c36 = arith.constant 36 : index
    %18 = vector.load %arg1[%c0_19, %c0_20, %c36] : memref<1x8x432xbf16, #tpu.memory_space<vmem>>, vector<1x8x384xbf16>
    %19 = vector.shape_cast %18 : vector<1x8x384xbf16> to vector<8x384xbf16>
    %c48 = arith.constant 48 : index
    %c0_21 = arith.constant 0 : index
    %20 = vector.load %arg5[%c48, %c0_21] : memref<72x384xbf16, #tpu.memory_space<vmem>>, vector<8x384xbf16>
    tpu.vector_store %arg5[%c48, %c0_21], %19 {strides = array<i32>} : memref<72x384xbf16, #tpu.memory_space<vmem>>, vector<8x384xbf16>,
    %c0_22 = arith.constant 0 : index
    %c0_23 = arith.constant 0 : index
    %c37 = arith.constant 37 : index
    %21 = vector.load %arg1[%c0_22, %c0_23, %c37] : memref<1x8x432xbf16, #tpu.memory_space<vmem>>, vector<1x8x384xbf16>
    %22 = vector.shape_cast %21 : vector<1x8x384xbf16> to vector<8x384xbf16>
    %c56 = arith.constant 56 : index
    %c0_24 = arith.constant 0 : index
    %23 = vector.load %arg5[%c56, %c0_24] : memref<72x384xbf16, #tpu.memory_space<vmem>>, vector<8x384xbf16>
    tpu.vector_store %arg5[%c56, %c0_24], %22 {strides = array<i32>} : memref<72x384xbf16, #tpu.memory_space<vmem>>, vector<8x384xbf16>,
    %c0_25 = arith.constant 0 : index
    %c0_26 = arith.constant 0 : index
    %c38 = arith.constant 38 : index
    %24 = vector.load %arg1[%c0_25, %c0_26, %c38] : memref<1x8x432xbf16, #tpu.memory_space<vmem>>, vector<1x8x384xbf16>
    %25 = vector.shape_cast %24 : vector<1x8x384xbf16> to vector<8x384xbf16>
    %c64 = arith.constant 64 : index
    %c0_27 = arith.constant 0 : index
    %26 = vector.load %arg5[%c64, %c0_27] : memref<72x384xbf16, #tpu.memory_space<vmem>>, vector<8x384xbf16>
    tpu.vector_store %arg5[%c64, %c0_27], %25 {strides = array<i32>} : memref<72x384xbf16, #tpu.memory_space<vmem>>, vector<8x384xbf16>,
    %c0_28 = arith.constant 0 : index
    %c0_29 = arith.constant 0 : index
    %27 = vector.load %arg2[%c0_28, %c0_29] : memref<8x72xbf16, #tpu.memory_space<vmem>>, vector<8x72xbf16>
    %c0_30 = arith.constant 0 : index
    %c0_31 = arith.constant 0 : index
    %28 = vector.load %arg5[%c0_30, %c0_31] : memref<72x384xbf16, #tpu.memory_space<vmem>>, vector<72x384xbf16>
    %cst = arith.constant dense<0.000000e+00> : vector<8x384xf32>
    %29 = tpu.matmul %27, %28, %cst {dimension_numbers = #tpu.dot_dimension_numbers<[1], [0], [0], [1], [0, 0, 1, 1], [], []>} : vector<8x72xbf16>, vector<72x384xbf16>, vector<8x384xf32> -> vector<8x384xf32>
    %c0_32 = arith.constant 0 : index
    %c0_33 = arith.constant 0 : index
    %30 = vector.load %arg3[%c0_32, %c0_33] : memref<8x384xf32, #tpu.memory_space<vmem>>, vector<8x384xf32>
    %31 = arith.addf %29, %30 : vector<8x384xf32>
    %cst_34 = arith.constant 0.000000e+00 : f32
    %32 = vector.broadcast %cst_34 : f32 to vector<8x384xf32>
    %33 = arith.maximumf %31, %32 : vector<8x384xf32>
    %c0_35 = arith.constant 0 : index
    %c0_36 = arith.constant 0 : index
    %c0_37 = arith.constant 0 : index
    %34 = vector.load %arg4[%c0_35, %c0_36, %c0_37] : memref<1x8x384xf32, #tpu.memory_space<vmem>>, vector<1x8x384xf32>
    %35 = vector.shape_cast %34 : vector<1x8x384xf32> to vector<8x384xf32>
    %36 = vector.shape_cast %33 : vector<8x384xf32> to vector<1x8x384xf32>
    tpu.vector_store %arg4[%c0_35, %c0_36, %c0_37], %36 {strides = array<i32>} : memref<1x8x384xf32, #tpu.memory_space<vmem>>, vector<1x8x384xf32>,
    return
  }
  func.func @transform_0(%arg0: i32) -> (i32, i32, i32) {
    %c0_i32 = arith.constant 0 : i32
    %c0_i32_0 = arith.constant 0 : i32
    %c0_i32_1 = arith.constant 0 : i32
    return %arg0, %c0_i32, %c0_i32_0 : i32, i32, i32
  }
  func.func @transform_1(%arg0: i32) -> (i32, i32) {
    %c0_i32 = arith.constant 0 : i32
    %c0_i32_0 = arith.constant 0 : i32
    %c0_i32_1 = arith.constant 0 : i32
    return %c0_i32, %c0_i32_0 : i32, i32
  }
  func.func @transform_2(%arg0: i32) -> (i32, i32) {
    %c0_i32 = arith.constant 0 : i32
    %c0_i32_0 = arith.constant 0 : i32
    %c0_i32_1 = arith.constant 0 : i32
    return %c0_i32, %c0_i32_0 : i32, i32
  }
  func.func @transform_3(%arg0: i32) -> (i32, i32, i32) {
    %c0_i32 = arith.constant 0 : i32
    %c0_i32_0 = arith.constant 0 : i32
    %c0_i32_1 = arith.constant 0 : i32
    return %arg0, %c0_i32, %c0_i32_0 : i32, i32, i32
  }
}

</mosaic_0001>

<llo_original>
// kernel: coordconv_forward.1
$region0: #{coordconv_forward.1}
  #allocation0 [shape = 'u32[]', space=smem, size = 0x4, offset = 0x4, fixed_abs, tag = 'smem constant byte address 0x4 - core index']
  #allocation1 [shape = 'u32[72,128]{1,0:T(1,128)}', space=vmem, size = 0x9000, scoped, tag = 'internal scratch']
  #allocation2 [shape = 'bf16[72,384]{1,0:T(8,128)(2,1)}', space=vmem, size = 0xd800, scoped, tag = 'scratch operand']
  %s0 = inlined_call_operand.vmem [shape: bf16[2,8,432], index: 0, kind: input, shape index: {}]
  %s1 = inlined_call_operand.vmem [shape: bf16[8,72], index: 1, kind: input, shape index: {}]
  %s2 = inlined_call_operand.vmem [shape: f32[8,384], index: 2, kind: input, shape index: {}]
  %s3 = inlined_call_operand.vmem [shape: f32[2,8,384], index: 3, kind: output, shape index: {}]
  %s4 = sld [smem:[#allocation0]]
  $region45: #{coordconv_forward.1} parent=0
    _
  %s6 = ssub.s32 1, %s4
  %s7 = scalar_select 0, %s6, %s4
  loop: start=0, step=1, limit=4
  $region2: #{coordconv_forward.1} parent=0 // loop_pre_header
    _
  $region3: #{coordconv_forward.1} parent=0 // loop_header
    %s9 = sphi 0, %s13
    %p10 = scmp.ge.s32.totalorder %s9, 4
    %s19 = sphi 0, %s21
    %s22 = sphi 0, %s19
    %s23 = sphi 0, %s22
    %s39 = sphi 0, %s23
    %s43 = sphi 0, %s43
    %s45 = sphi 0, %s43
    %s46 = sphi 0, %s45
    %s60 = sphi 0, %s46
    %s64 = sphi 0, %s64
    %s66 = sphi 0, %s64
    %s67 = sphi 0, %s66
    %s81 = sphi 0, %s67
    %s87 = sphi 0, %s89
    %s90 = sphi 0, %s87
    %s91 = sphi 0, %s90
    %s107 = sphi 0, %s91
  $region4: #{coordconv_forward.1} parent=0 // loop_header_branch
    %12 = sbr.rel (%p10) target = $region8
  $region5: #{coordconv_forward.1} parent=0 // loop_body
    %s14 = ssub.s32 %s9, 1
    %s15 = ssub.s32 %s9, 2
    %s16 = sadd.s32 %s9, 1
    %s17 = ssub.s32 %s9, %s16
    %p18 = scmp.eq.s32.totalorder %s17, 0
    %s20 = sadd.s32 %s19, 1
    %s21 = scalar_select %p18, %s19, %s20
    %p24 = pneg %p18
    %p25 = scmp.eq.s32.totalorder %s9, 1
    %p26 = por %p24, %p25
    %p27 = scmp.ne.s32.totalorder %s19, %s22
    %p28 = scmp.eq.s32.totalorder %s9, 0
    %p29 = por %p27, %p28
    %p30 = scmp.ne.s32.totalorder %s19, %s22
    %p31 = scmp.eq.s32.totalorder %s14, 1
    %p32 = por %p30, %p31
    %p33 = scmp.ne.s32.totalorder %s22, %s23
    %p34 = scmp.eq.s32.totalorder %s14, 0
    %p35 = por %p33, %p34
    %p36 = scmp.ne.s32.totalorder %s22, %s23
    %p37 = scmp.eq.s32.totalorder %s15, 1
    %p38 = por %p36, %p37
    %p40 = scmp.ne.s32.totalorder %s23, %s39
    %p41 = scmp.eq.s32.totalorder %s15, 0
    %p42 = por %p40, %p41
    %s44 = sadd.s32 %s43, 1
    %p47 = scmp.eq.s32.totalorder %s9, 1
    %p48 = scmp.ne.s32.totalorder %s43, %s45
    %p49 = scmp.eq.s32.totalorder %s9, 0
    %p50 = por %p48, %p49
    %p51 = scmp.ne.s32.totalorder %s43, %s45
    %p52 = scmp.eq.s32.totalorder %s14, 1
    %p53 = por %p51, %p52
    %p54 = scmp.ne.s32.totalorder %s45, %s46
    %p55 = scmp.eq.s32.totalorder %s14, 0
    %p56 = por %p54, %p55
    %p57 = scmp.ne.s32.totalorder %s45, %s46
    %p58 = scmp.eq.s32.totalorder %s15, 1
    %p59 = por %p57, %p58
    %p61 = scmp.ne.s32.totalorder %s46, %s60
    %p62 = scmp.eq.s32.totalorder %s15, 0
    %p63 = por %p61, %p62
    %s65 = sadd.s32 %s64, 1
    %p68 = scmp.eq.s32.totalorder %s9, 1
    %p69 = scmp.ne.s32.totalorder %s64, %s66
    %p70 = scmp.eq.s32.totalorder %s9, 0
    %p71 = por %p69, %p70
    %p72 = scmp.ne.s32.totalorder %s64, %s66
    %p73 = scmp.eq.s32.totalorder %s14, 1
    %p74 = por %p72, %p73
    %p75 = scmp.ne.s32.totalorder %s66, %s67
    %p76 = scmp.eq.s32.totalorder %s14, 0
    %p77 = por %p75, %p76
    %p78 = scmp.ne.s32.totalorder %s66, %s67
    %p79 = scmp.eq.s32.totalorder %s15, 1
    %p80 = por %p78, %p79
    %p82 = scmp.ne.s32.totalorder %s67, %s81
    %p83 = scmp.eq.s32.totalorder %s15, 0
    %p84 = por %p82, %p83
    %s85 = ssub.s32 %s9, %s16
    %p86 = scmp.eq.s32.totalorder %s85, 0
    %s88 = sadd.s32 %s87, 1
    %s89 = scalar_select %p86, %s87, %s88
    %p92 = pneg %p86
    %p93 = scmp.eq.s32.totalorder %s9, 1
    %p94 = por %p92, %p93
    %p95 = scmp.ne.s32.totalorder %s87, %s90
    %p96 = scmp.eq.s32.totalorder %s9, 0
    %p97 = por %p95, %p96
    %p98 = scmp.ne.s32.totalorder %s87, %s90
    %p99 = scmp.eq.s32.totalorder %s14, 1
    %p100 = por %p98, %p99
    %p101 = scmp.ne.s32.totalorder %s90, %s91
    %p102 = scmp.eq.s32.totalorder %s14, 0
    %p103 = por %p101, %p102
    %p104 = scmp.ne.s32.totalorder %s90, %s91
    %p105 = scmp.eq.s32.totalorder %s15, 1
    %p106 = por %p104, %p105
    %p108 = scmp.ne.s32.totalorder %s91, %s107
    %p109 = scmp.eq.s32.totalorder %s15, 0
    %p110 = por %p108, %p109
    %p111 = scmp.le.s32.totalorder 1, %s9
    %p112 = scmp.lt.s32.totalorder %s9, 3
    %p113 = pnand %p111, %p112
    %p114 = pneg %p113
    // Predicated region
    $region9: #{coordconv_forward.1} parent=5 // pred_check
      _
    $region10: #{coordconv_forward.1} parent=5 // pred_check_branch
      %116 = sbr.rel (%p113) target = $region12
    $region11: #{coordconv_forward.1} parent=5 // pred_region
      %s117 = ssub.s32 %s9, 1
      // Predicated region
      $region13: #{coordconv_forward.1} parent=11 // pred_check
        %p118 = pneg %p56
      $region14: #{coordconv_forward.1} parent=11 // pred_check_branch
        %120 = sbr.rel (%p118) target = $region16
      $region15: #{coordconv_forward.1} parent=11 // pred_region
        _
      $region16: #{coordconv_forward.1} parent=11 // pred_fallthru
        _
      // Predicated region
      $region17: #{coordconv_forward.1} parent=11 // pred_check
        %p121 = pneg %p77
      $region18: #{coordconv_forward.1} parent=11 // pred_check_branch
        %123 = sbr.rel (%p121) target = $region20
      $region19: #{coordconv_forward.1} parent=11 // pred_region
        _
      $region20: #{coordconv_forward.1} parent=11 // pred_fallthru
        _
    $region12: #{coordconv_forward.1} parent=5 // pred_fallthru
      _
    %p124 = scmp.lt.s32.totalorder %s9, 2
    // Predicated region
    $region21: #{coordconv_forward.1} parent=5 // pred_check
      %p125 = pneg %p124
    $region22: #{coordconv_forward.1} parent=5 // pred_check_branch
      %127 = sbr.rel (%p125) target = $region24
    $region23: #{coordconv_forward.1} parent=5 // pred_region
      // Predicated region
      $region25: #{coordconv_forward.1} parent=23 // pred_check
        %p128 = pneg %p29
      $region26: #{coordconv_forward.1} parent=23 // pred_check_branch
        %130 = sbr.rel (%p128) target = $region28
      $region27: #{coordconv_forward.1} parent=23 // pred_region
        %p131 = scmp.lt.s32.totalorder %s9, 1
        %s132 = scalar_select %p131, %s9, 1
        %s133 = smul.addr %s132, 4
        %s134 = smul.addr %s133, 4
        %s135 = scalar_lea.vmem %s0, %s134
      $region28: #{coordconv_forward.1} parent=23 // pred_fallthru
        _
    $region24: #{coordconv_forward.1} parent=5 // pred_fallthru
      _
    %p136 = scmp.le.s32.totalorder 1, %s9
    %p137 = scmp.lt.s32.totalorder %s9, 3
    %p138 = pnand %p136, %p137
    %p139 = pneg %p138
    // Predicated region
    $region29: #{coordconv_forward.1} parent=5 // pred_check
      _
    $region30: #{coordconv_forward.1} parent=5 // pred_check_branch
      %141 = sbr.rel (%p138) target = $region32
    $region31: #{coordconv_forward.1} parent=5 // pred_region
      %s142 = ssub.s32 %s9, 1
      %p143 = scmp.lt.s32.totalorder %s14, 1
      %s144 = scalar_select %p143, %s14, 1
      %s145 = smul.addr %s144, 4
      %s146 = smul.addr %s145, 4
      %s147 = scalar_lea.vmem %s0, %s146
      %p148 = pneg %p35
      %p149 = pneg %p32
      %p150 = pneg %p56
      %p151 = pneg %p53
      %p152 = pneg %p77
      %p153 = pneg %p74
      %p154 = pneg %p103
      %p155 = pneg %p100
      %p156 = scmp.lt.s32.totalorder %s14, 1
      %s157 = scalar_select %p156, %s14, 1
      %s158 = smul.addr %s157, 3
      %s159 = smul.addr %s158, 8
      %s160 = scalar_lea.vmem %s3, %s159
      %p161 = scmp.lt.s32.totalorder %s14, 1
      %s162 = scalar_select %p161, %s14, 1
      %s163 = smul.addr %s162, 4
      %s164 = smul.addr %s163, 4
      %s165 = scalar_lea.vmem %s0, %s164
      %p166 = scmp.lt.s32.totalorder %s14, 1
      %s167 = scalar_select %p166, %s14, 1
      %s168 = smul.addr %s167, 3
      %s169 = smul.addr %s168, 8
      %s170 = scalar_lea.vmem %s3, %s169
      %v172 = vld [vmem:[%s165] sm:$0xff]
      %v173 = vld [vmem:[%s165 + $0x8] sm:$0xf]
      %174 = vst [vmem:[#allocation2] sm:$0xff] %v172
      %175 = vst [vmem:[#allocation2 + $0x8] sm:$0xf] %v173
      %v176 = vld [vmem:[%s165] sm:$0xff]
      %v177 = vld [vmem:[%s165 + $0x8] sm:$0xff]
      %180 = vrot.lane.b32.xlu0 %v176, 127
      %v181 = vpop.permute.xlu0 %180
      %182 = vrot.lane.b32.xlu0 %v177, 127
      %v183 = vpop.permute.xlu0 %182
      %v184 = vrot.slane %v181, 4
      %v185 = vrot.slane %v183, 4
      %vm186 = vcmask 1043456
      %v187 = vsel %vm186, %v184, %v185
      %vm188 = vcmask 1039360
      %v189 = vsel %vm188, %v181, %v187
      %v190 = vsel %vm188, %v183, %v185
      %193 = vst [vmem:[#allocation2 + $0xc] sm:$0xff] %v189
      %194 = vst [vmem:[#allocation2 + $0x14] sm:$0xf] %v190
      %v195 = vld [vmem:[%s165] sm:$0xff]
      %v196 = vld [vmem:[%s165 + $0x8] sm:$0xff]
      %199 = vrot.lane.b32.xlu0 %v195, 126
      %v200 = vpop.permute.xlu0 %199
      %201 = vrot.lane.b32.xlu0 %v196, 126
      %v202 = vpop.permute.xlu0 %201
      %v203 = vrot.slane %v200, 4
      %v204 = vrot.slane %v202, 4
      %v205 = vsel %vm186, %v203, %v204
      %vm206 = vcmask 1031168
      %v207 = vsel %vm206, %v200, %v205
      %v208 = vsel %vm206, %v202, %v204
      %211 = vst [vmem:[#allocation2 + $0x18] sm:$0xff] %v207
      %212 = vst [vmem:[#allocation2 + $0x20] sm:$0xf] %v208
      %v213 = vld [vmem:[%s165] sm:$0xff]
      %v214 = vld [vmem:[%s165 + $0x8] sm:$0xff]
      %217 = vrot.lane.b32.xlu0 %v213, 110
      %v218 = vpop.permute.xlu0 %217
      %219 = vrot.lane.b32.xlu0 %v214, 110
      %v220 = vpop.permute.xlu0 %219
      %v221 = vrot.slane %v218, 4
      %v222 = vrot.slane %v220, 4
      %v223 = vsel %vm186, %v221, %v222
      %vm224 = vcmask 900096
      %v225 = vsel %vm224, %v218, %v223
      %v226 = vsel %vm224, %v220, %v222
      %229 = vst [vmem:[#allocation2 + $0x24] sm:$0xff] %v225
      %230 = vst [vmem:[#allocation2 + $0x2c] sm:$0xf] %v226
      %v231 = vld [vmem:[%s165] sm:$0xff]
      %v232 = vld [vmem:[%s165 + $0x8] sm:$0xff]
      %235 = vrot.lane.b32.xlu0 %v231, 109
      %v236 = vpop.permute.xlu0 %235
      %237 = vrot.lane.b32.xlu0 %v232, 109
      %v238 = vpop.permute.xlu0 %237
      %v239 = vrot.slane %v236, 4
      %v240 = vrot.slane %v238, 4
      %v241 = vsel %vm186, %v239, %v240
      %vm242 = vcmask 891904
      %v243 = vsel %vm242, %v236, %v241
      %v244 = vsel %vm242, %v238, %v240
      %247 = vst [vmem:[#allocation2 + $0x30] sm:$0xff] %v243
      %248 = vst [vmem:[#allocation2 + $0x38] sm:$0xf] %v244
      %v249 = vld [vmem:[%s165] sm:$0xff]
      %v250 = vld [vmem:[%s165 + $0x8] sm:$0xff]
      %253 = vrot.lane.b32.xlu0 %v249, 108
      %v254 = vpop.permute.xlu0 %253
      %255 = vrot.lane.b32.xlu0 %v250, 108
      %v256 = vpop.permute.xlu0 %255
      %v257 = vrot.slane %v254, 4
      %v258 = vrot.slane %v256, 4
      %v259 = vsel %vm186, %v257, %v258
      %vm260 = vcmask 883712
      %v261 = vsel %vm260, %v254, %v259
      %v262 = vsel %vm260, %v256, %v258
      %265 = vst [vmem:[#allocation2 + $0x3c] sm:$0xff] %v261
      %266 = vst [vmem:[#allocation2 + $0x44] sm:$0xf] %v262
      %v267 = vld [vmem:[%s165] sm:$0xff]
      %v268 = vld [vmem:[%s165 + $0x8] sm:$0xff]
      %271 = vrot.lane.b32.xlu0 %v267, 92
      %v272 = vpop.permute.xlu0 %271
      %273 = vrot.lane.b32.xlu0 %v268, 92
      %v274 = vpop.permute.xlu0 %273
      %v275 = vrot.slane %v272, 4
      %v276 = vrot.slane %v274, 4
      %v277 = vsel %vm186, %v275, %v276
      %vm278 = vcmask 752640
      %v279 = vsel %vm278, %v272, %v277
      %v280 = vsel %vm278, %v274, %v276
      %283 = vst [vmem:[#allocation2 + $0x48] sm:$0xff] %v279
      %284 = vst [vmem:[#allocation2 + $0x50] sm:$0xf] %v280
      %v285 = vld [vmem:[%s165] sm:$0xff]
      %v286 = vld [vmem:[%s165 + $0x8] sm:$0xff]
      %289 = vrot.lane.b32.xlu0 %v285, 91
      %v290 = vpop.permute.xlu0 %289
      %291 = vrot.lane.b32.xlu0 %v286, 91
      %v292 = vpop.permute.xlu0 %291
      %v293 = vrot.slane %v290, 4
      %v294 = vrot.slane %v292, 4
      %v295 = vsel %vm186, %v293, %v294
      %vm296 = vcmask 744448
      %v297 = vsel %vm296, %v290, %v295
      %v298 = vsel %vm296, %v292, %v294
      %301 = vst [vmem:[#allocation2 + $0x54] sm:$0xff] %v297
      %302 = vst [vmem:[#allocation2 + $0x5c] sm:$0xf] %v298
      %v303 = vld [vmem:[%s165] sm:$0xff]
      %v304 = vld [vmem:[%s165 + $0x8] sm:$0xff]
      %307 = vrot.lane.b32.xlu0 %v303, 90
      %v308 = vpop.permute.xlu0 %307
      %309 = vrot.lane.b32.xlu0 %v304, 90
      %v310 = vpop.permute.xlu0 %309
      %v311 = vrot.slane %v308, 4
      %v312 = vrot.slane %v310, 4
      %v313 = vsel %vm186, %v311, %v312
      %vm314 = vcmask 736256
      %v315 = vsel %vm314, %v308, %v313
      %v316 = vsel %vm314, %v310, %v312
      %319 = vst [vmem:[#allocation2 + $0x60] sm:$0xff] %v315
      %320 = vst [vmem:[#allocation2 + $0x68] sm:$0xf] %v316
      %v321 = vld [vmem:[%s1] sm:$0xf]
      %v322 = vld [vmem:[#allocation2] sm:$0xff]
      %v323 = vld [vmem:[#allocation2 + $0x8] sm:$0xf]
      %v324 = vld [vmem:[#allocation2 + $0xc] sm:$0xff]
      %v325 = vld [vmem:[#allocation2 + $0x14] sm:$0xf]
      %v326 = vld [vmem:[#allocation2 + $0x18] sm:$0xff]
      %v327 = vld [vmem:[#allocation2 + $0x20] sm:$0xf]
      %v328 = vld [vmem:[#allocation2 + $0x24] sm:$0xff]
      %v329 = vld [vmem:[#allocation2 + $0x2c] sm:$0xf]
      %v330 = vld [vmem:[#allocation2 + $0x30] sm:$0xff]
      %v331 = vld [vmem:[#allocation2 + $0x38] sm:$0xf]
      %v332 = vld [vmem:[#allocation2 + $0x3c] sm:$0xff]
      %v333 = vld [vmem:[#allocation2 + $0x44] sm:$0xf]
      %v334 = vld [vmem:[#allocation2 + $0x48] sm:$0xff]
      %v335 = vld [vmem:[#allocation2 + $0x50] sm:$0xf]
      %v336 = vld [vmem:[#allocation2 + $0x54] sm:$0xff]
      %v337 = vld [vmem:[#allocation2 + $0x5c] sm:$0xf]
      %v338 = vld [vmem:[#allocation2 + $0x60] sm:$0xff]
      %v339 = vld [vmem:[#allocation2 + $0x68] sm:$0xf]
      %v340 = vld [vmem:[%s2] sm:$0xff]
      %v341 = vld [vmem:[%s2 + $0x8] sm:$0xff]
      %v342 = vld [vmem:[%s2 + $0x10] sm:$0xff]
      %v361 = vunpack.c.l.b16 %v322
      %v362 = vunpack.c.h.b16 %v322
      %v363 = vunpack.c.l.b16 %v323
      %v364 = vunpack.c.l.b16 %v324
      %v365 = vunpack.c.h.b16 %v324
      %v366 = vunpack.c.l.b16 %v325
      %v367 = vunpack.c.l.b16 %v326
      %v368 = vunpack.c.h.b16 %v326
      %v369 = vunpack.c.l.b16 %v327
      %v370 = vunpack.c.l.b16 %v328
      %v371 = vunpack.c.h.b16 %v328
      %v372 = vunpack.c.l.b16 %v329
      %v373 = vunpack.c.l.b16 %v330
      %v374 = vunpack.c.h.b16 %v330
      %v375 = vunpack.c.l.b16 %v331
      %v376 = vunpack.c.l.b16 %v332
      %v377 = vunpack.c.h.b16 %v332
      %v378 = vunpack.c.l.b16 %v333
      %v379 = vunpack.c.l.b16 %v334
      %v380 = vunpack.c.h.b16 %v334
      %v381 = vunpack.c.l.b16 %v335
      %v382 = vunpack.c.l.b16 %v336
      %v383 = vunpack.c.h.b16 %v336
      %v384 = vunpack.c.l.b16 %v337
      %v385 = vunpack.c.l.b16 %v338
      %v386 = vunpack.c.h.b16 %v338
      %v387 = vunpack.c.l.b16 %v339
      %v388 = vpack.c.b16 %v364, %v361
      %v389 = vpack.c.b16 %v365, %v362
      %v390 = vpack.c.b16 %v366, %v363
      %v391 = vpack.c.b16 %v370, %v367
      %v392 = vpack.c.b16 %v371, %v368
      %v393 = vpack.c.b16 %v372, %v369
      %v394 = vpack.c.b16 %v376, %v373
      %v395 = vpack.c.b16 %v377, %v374
      %v396 = vpack.c.b16 %v378, %v375
      %v397 = vpack.c.b16 %v382, %v379
      %v398 = vpack.c.b16 %v383, %v380
      %v399 = vpack.c.b16 %v384, %v381
      %v400 = vpack.c.b16 %v385, %v385
      %v401 = vpack.c.b16 %v386, %v386
      %v402 = vpack.c.b16 %v387, %v387
      %vm415 = vcmask 588800
      %v417 = vsel %vm415, %v321, 0
      %vm419 = vcmask 1043456
      %v421 = vsel %vm419, %v400, 0
      %v424 = vsel %vm419, %v401, 0
      %v427 = vsel %vm419, %v402, 0
      %429 = vmatpush.bf16.msra.mxu0 0
      %430 = vmatpush.bf16.msra.mxu0 0
      %431 = vmatpush.bf16.msra.mxu0 0
      %432 = vmatpush.bf16.msra.mxu0 %v421
      %433 = vmatpush.bf16.msra.mxu0 %v397
      %434 = vmatpush.bf16.msra.mxu0 %v394
      %435 = vmatpush.bf16.msra.mxu0 %v391
      %436 = vmatpush.bf16.msra.mxu0 %v388
      %437 = vmatmul.bf16.gmra.mxu0 %v417
      %v438 = vpop.f32.mrf.mxu0
      %v439 = vadd.f32 %v340, %v438
      %v440 = vpop.f32.mrf.mxu0
      %441 = vdwg.mxu0
      %442 = vmatpush.bf16.msra.mxu0 0
      %443 = vmatpush.bf16.msra.mxu0 0
      %444 = vmatpush.bf16.msra.mxu0 0
      %445 = vmatpush.bf16.msra.mxu0 %v424
      %446 = vmatpush.bf16.msra.mxu0 %v398
      %447 = vmatpush.bf16.msra.mxu0 %v395
      %448 = vmatpush.bf16.msra.mxu0 %v392
      %449 = vmatpush.bf16.msra.mxu0 %v389
      %450 = vmatmul.bf16.gmra.mxu0 %v417
      %v451 = vpop.f32.mrf.mxu0
      %v452 = vadd.f32 %v341, %v451
      %v453 = vpop.f32.mrf.mxu0
      %454 = vdwg.mxu0
      %455 = vmatpush.bf16.msra.mxu0 0
      %456 = vmatpush.bf16.msra.mxu0 0
      %457 = vmatpush.bf16.msra.mxu0 0
      %458 = vmatpush.bf16.msra.mxu0 %v427
      %459 = vmatpush.bf16.msra.mxu0 %v399
      %460 = vmatpush.bf16.msra.mxu0 %v396
      %461 = vmatpush.bf16.msra.mxu0 %v393
      %462 = vmatpush.bf16.msra.mxu0 %v390
      %463 = vmatmul.bf16.gmra.mxu0 %v417
      %v464 = vpop.f32.mrf.mxu0
      %v465 = vadd.f32 %v342, %v464
      %v466 = vpop.f32.mrf.mxu0
      %467 = vdwg.mxu0
      %v468 = vmax.f32 %v439, 0.0
      %v469 = vmax.f32 %v452, 0.0
      %v470 = vmax.f32 %v465, 0.0
      %471 = vst [vmem:[%s170] sm:$0xff] %v468
      %472 = vst [vmem:[%s170 + $0x8] sm:$0xff] %v469
      %473 = vst [vmem:[%s170 + $0x10] sm:$0xff] %v470
      %p474 = scmp.lt.s32.totalorder %s14, 1
      %s475 = scalar_select %p474, %s14, 1
      %s476 = smul.addr %s475, 3
      %s477 = smul.addr %s476, 8
      %s478 = scalar_lea.vmem %s3, %s477
      // Predicated region
      $region33: #{coordconv_forward.1} parent=31 // pred_check
        %p479 = pneg %p100
      $region34: #{coordconv_forward.1} parent=31 // pred_check_branch
        %481 = sbr.rel (%p479) target = $region36
      $region35: #{coordconv_forward.1} parent=31 // pred_region
        _
      $region36: #{coordconv_forward.1} parent=31 // pred_fallthru
        _
    $region32: #{coordconv_forward.1} parent=5 // pred_fallthru
      _
    %p482 = scmp.le.s32.totalorder 2, %s9
    // Predicated region
    $region37: #{coordconv_forward.1} parent=5 // pred_check
      %p483 = pneg %p482
    $region38: #{coordconv_forward.1} parent=5 // pred_check_branch
      %485 = sbr.rel (%p483) target = $region40
    $region39: #{coordconv_forward.1} parent=5 // pred_region
      %s486 = ssub.s32 %s9, 2
      // Predicated region
      $region41: #{coordconv_forward.1} parent=39 // pred_check
        %p487 = pneg %p106
      $region42: #{coordconv_forward.1} parent=39 // pred_check_branch
        %489 = sbr.rel (%p487) target = $region44
      $region43: #{coordconv_forward.1} parent=39 // pred_region
        %p490 = scmp.lt.s32.totalorder %s15, 1
        %s491 = scalar_select %p490, %s15, 1
        %s492 = smul.addr %s491, 3
        %s493 = smul.addr %s492, 8
        %s494 = scalar_lea.vmem %s3, %s493
      $region44: #{coordconv_forward.1} parent=39 // pred_fallthru
        _
    $region40: #{coordconv_forward.1} parent=5 // pred_fallthru
      _
  $region6: #{coordconv_forward.1} parent=0 // loop_footer
    %s13 = sadd.s32 1, %s9
  $region7: #{coordconv_forward.1} parent=0 // loop_footer_branch
    %8 = sbr.rel target = $region3
  $region8: #{coordconv_forward.1} parent=0 // loop_exit
    _

</llo_original>
